<compile_context>
chip_gen: v7x
topology: tpu7x:2x2x1
jax: 0.10.0
libtpu: 0.0.40
codegen_flags: <defaults>
</compile_context>

<pallas_src>
from functools import partial

import jax
import jax.numpy as jnp
from jax import lax
from jax.experimental import pallas as pl
from jax.experimental.pallas import tpu as pltpu


# --------------------------------------------------------------------------
# Kernels
# --------------------------------------------------------------------------
def _stats_kernel(x_ref, sx_ref, g_ref, *, hw, thw, needs_mask, compute_dtype):
    """Phase 1: per-tile X-moments.

    sx = sum_p X[:, p]                      -> (Cin, 1)
    G  = X @ X^T (contracted over pixels)   -> (Cin, Cin), MXU long-K matmul

    BN stats of Y = W @ X are recovered in the wrapper as mean = W sx / M and
    E[Y^2]_o = (W G W^T)_oo / M, so no [Cout, thw] Y tile, no y*y pass and no
    per-Cout cross-lane reductions are materialized."""
    x = x_ref[0]                                                # [Cin, thw] f32
    if needs_mask:
        # Tail tile of a non-dividing H*W: zero out-of-range pixels so the
        # undefined padded reads never pollute the statistics.
        valid = hw - pl.program_id(1) * thw
        lane = lax.broadcasted_iota(jnp.int32, x.shape, 1)
        x = jnp.where(lane < valid, x, 0.0)
    xb = x.astype(compute_dtype)            # same bf16 rounding phase 2 uses
    sx_ref[0, 0] = jnp.sum(xb.astype(jnp.float32), axis=1, keepdims=True)
    g_ref[0, 0] = lax.dot_general(xb, xb, (((1,), (1,)), ((), ())),
                                  preferred_element_type=jnp.float32)


def _apply_kernel(x_ref, w_ref, b_ref, o_ref, *, compute_dtype):
    """Phase 2: Y = W' @ X with the BN scale folded into W'; out = relu(Y+b).
    X arrives in f32 and is cast to bf16 under the DMA; the store is
    lane-dense in the (narrow) consumer dtype."""
    xb = x_ref[0].astype(compute_dtype)                         # [Cin, thw]
    y = jnp.dot(w_ref[...], xb, preferred_element_type=jnp.float32)
    o_ref[0] = jnp.maximum(y + b_ref[...], 0.0).astype(o_ref.dtype)


def _fused_kernel(x_ref, w_ref, gam_ref, bet_ref, o_ref, y_scr,
                  *, eps, m, compute_dtype):
    """Single-kernel fast path for small layers: X, Y and the output all fit
    in VMEM, so the conv runs once, BN statistics are reduced in-kernel and
    the fused affine + ReLU is applied with no second HBM read of X and no
    second kernel launch."""
    n_img = x_ref.shape[0]
    cout = w_ref.shape[0]
    w = w_ref[...]                                              # [Cout, Cin]
    s = jnp.zeros((cout, 1), jnp.float32)
    ss = jnp.zeros((cout, 1), jnp.float32)
    for n in range(n_img):                                      # static unroll
        yn = jnp.dot(w, x_ref[n].astype(compute_dtype),
                     preferred_element_type=jnp.float32)        # [Cout, HW]
        y_scr[n] = yn
        s = s + jnp.sum(yn, axis=1, keepdims=True)
        ss = ss + jnp.sum(yn * yn, axis=1, keepdims=True)
    inv_m = 1.0 / m
    mean = s * inv_m
    var = jnp.maximum(ss * inv_m - mean * mean, 0.0)
    a = gam_ref[...] * lax.rsqrt(var + eps)
    b = bet_ref[...] - mean * a
    for n in range(n_img):
        o_ref[n] = jnp.maximum(y_scr[n] * a + b, 0.0).astype(o_ref.dtype)


# --------------------------------------------------------------------------
# VMEM-aware tiling
# --------------------------------------------------------------------------
def _vmem_limits():
    """Per-generation VMEM sizing.

    Returns (scoped_limit_bytes, block_budget_bytes).  v5e/v6e: 128 MiB
    physical / 16-32 MiB default scoped; v7x: 64 MiB physical / 32 MiB scoped
    per TensorCore.  We request an explicit scoped limit and budget live
    (double-buffered) blocks + in-kernel temporaries well inside it."""
    try:
        phys = int(pltpu.get_tpu_info().vmem_capacity_bytes)
    except Exception:        # conservative fallback: v7x-sized per-TC VMEM
        phys = 64 << 20
    scoped = min(phys // 2, 32 << 20)
    return scoped, (scoped * 3) // 8


def _pick_hw_tile(hw, cin, cout, out_itemsize, budget_bytes):
    """Largest multiple-of-128 pixel tile whose live VMEM footprint
    (double-buffered f32 X block, double-buffered output block, bf16 X / f32
    Y / pre-cast output / iota temporaries) fits `budget_bytes`.  Prefers a
    tile that divides hw exactly (no tail masking); otherwise returns the
    capped tile and the caller masks the tail."""
    per_px = (2 * cin * 4                      # X block, f32, double buffered
              + 2 * cout * out_itemsize        # output block, double buffered
              + cin * 2                        # bf16 cast of X
              + cout * 4                       # f32 Y
              + cout * 4                       # f32 pre-cast output
              + cin * 4)                       # iota / mask
    cap = max(((budget_bytes // per_px) // 128) * 128, 128)
    if hw <= cap:
        return hw                              # full row (lane-masked if small)
    t = cap
    while t >= max(cap // 2, 128):
        if hw % t == 0:
            return t
        t -= 128
    return cap                                 # no nice divisor: mask the tail


# --------------------------------------------------------------------------
# Public wrapper
# --------------------------------------------------------------------------
@partial(jax.jit,
         static_argnames=("eps", "compute_dtype", "out_dtype", "allow_fused"))
def pointconv_bn_relu(x_nchw, weight_oihw, gamma, beta, eps=1e-5,
                      compute_dtype=jnp.bfloat16, out_dtype=jnp.bfloat16,
                      allow_fused=True):
    """x: [N, Cin, H, W] f32; weight: [Cout, Cin, 1, 1]; gamma/beta: [Cout].

    Returns relu(batchnorm(conv1x1(x))) in `out_dtype` (bf16 by default to
    halve the output HBM stream; pass jnp.float32 if the consumer needs it)."""
    N, Cin, H, W = x_nchw.shape
    Cout = weight_oihw.shape[0]
    HW = H * W
    M = N * HW
    out_itemsize = jnp.dtype(out_dtype).itemsize

    x3 = x_nchw.reshape(N, Cin, HW)            # free view; stays f32
    w2 = weight_oihw.reshape(Cout, Cin)
    wq = w2.astype(compute_dtype)              # tiny (Cout*Cin elements)
    g2 = gamma.reshape(Cout, 1).astype(jnp.float32)
    b2 = beta.reshape(Cout, 1).astype(jnp.float32)

    scoped_vmem, block_budget = _vmem_limits()

    # ---------------- single-kernel fast path for small layers --------------
    fused_bytes = N * HW * (Cin * 4 + Cin * 2 + Cout * 4 + Cout * 4
                            + Cout * out_itemsize)
    if allow_fused and fused_bytes <= block_budget:
        kernel = partial(_fused_kernel, eps=float(eps), m=float(M),
                         compute_dtype=compute_dtype)
        out = pl.pallas_call(
            kernel,
            out_shape=jax.ShapeDtypeStruct((N, Cout, HW), out_dtype),
            grid=(1,),
            in_specs=[pl.BlockSpec((N, Cin, HW), lambda i: (0, 0, 0)),
                      pl.BlockSpec((Cout, Cin), lambda i: (0, 0)),
                      pl.BlockSpec((Cout, 1), lambda i: (0, 0)),
                      pl.BlockSpec((Cout, 1), lambda i: (0, 0))],
            out_specs=pl.BlockSpec((N, Cout, HW), lambda i: (0, 0, 0)),
            scratch_shapes=[pltpu.VMEM((N, Cout, HW), jnp.float32)],
            compiler_params=pltpu.CompilerParams(
                dimension_semantics=("arbitrary",),
                vmem_limit_bytes=scoped_vmem),
            cost_estimate=pl.CostEstimate(
                flops=2 * M * Cin * Cout + 6 * M * Cout,
                transcendentals=Cout,
                bytes_accessed=M * Cin * 4 + M * Cout * out_itemsize),
        )(x3, wq, g2, b2)
        return out.reshape(N, Cout, H, W)

    # ------------------------- two-pass tiled path ---------------------------
    thw = _pick_hw_tile(HW, Cin, Cout, out_itemsize, block_budget)
    T = pl.cdiv(HW, thw)
    needs_mask = (HW % thw) != 0
    grid = (N, T)

    x_spec = pl.BlockSpec((1, Cin, thw), lambda n, t: (n, 0, t))
    cparams = pltpu.CompilerParams(
        dimension_semantics=("parallel", "parallel"),
        vmem_limit_bytes=scoped_vmem)

    # Phase 1: per-tile X moments (pixel sums + Gram on the MXU).
    stats_kernel = partial(_stats_kernel, hw=HW, thw=thw,
                           needs_mask=needs_mask, compute_dtype=compute_dtype)
    sx_p, g_p = pl.pallas_call(
        stats_kernel,
        out_shape=(jax.ShapeDtypeStruct((N, T, Cin, 1), jnp.float32),
                   jax.ShapeDtypeStruct((N, T, Cin, Cin), jnp.float32)),
        grid=grid,
        in_specs=[x_spec],
        out_specs=(pl.BlockSpec((1, 1, Cin, 1), lambda n, t: (n, t, 0, 0)),
                   pl.BlockSpec((1, 1, Cin, Cin), lambda n, t: (n, t, 0, 0))),
        compiler_params=cparams,
        cost_estimate=pl.CostEstimate(
            flops=2 * M * Cin * Cin + M * Cin,
            transcendentals=0,
            bytes_accessed=M * Cin * 4 + N * T * (Cin + Cin * Cin) * 4),
    )(x3)

    # Fold the stats + gamma/beta into per-channel (W', b); all f32, all part
    # of the same jitted graph (no host-dispatched glue between the passes).
    sx = jnp.sum(sx_p, axis=(0, 1))                             # [Cin, 1]
    gram = jnp.sum(g_p, axis=(0, 1))                            # [Cin, Cin]
    wf = wq.astype(jnp.float32)                                 # bf16-rounded W
    mean = (wf @ sx) / M                                        # [Cout, 1]
    ey2 = jnp.sum((wf @ gram) * wf, axis=1, keepdims=True) / M  # [Cout, 1]
    var = jnp.maximum(ey2 - mean * mean, 0.0)                   # fp-cancel guard
    a = g2 * lax.rsqrt(var + eps)
    b = b2 - mean * a
    w_fold = (a * wf).astype(compute_dtype)                     # BN scale in W'

    # Phase 2: recompute Y with folded weights, relu(Y + b), lane-dense store.
    apply_kernel = partial(_apply_kernel, compute_dtype=compute_dtype)
    y = pl.pallas_call(
        apply_kernel,
        out_shape=jax.ShapeDtypeStruct((N, Cout, HW), out_dtype),
        grid=grid,
        in_specs=[x_spec,
                  pl.BlockSpec((Cout, Cin), lambda n, t: (0, 0)),
                  pl.BlockSpec((Cout, 1), lambda n, t: (0, 0))],
        out_specs=pl.BlockSpec((1, Cout, thw), lambda n, t: (n, 0, t)),
        compiler_params=cparams,
        cost_estimate=pl.CostEstimate(
            flops=2 * M * Cin * Cout + 2 * M * Cout,
            transcendentals=0,
            bytes_accessed=M * Cin * 4 + Cout * Cin * 2 + Cout * 4
            + M * Cout * out_itemsize),
    )(x3, w_fold, b)
    return y.reshape(N, Cout, H, W)


# --------------------------------------------------------------------------
# Reference (pure JAX, train-mode BN)
# --------------------------------------------------------------------------
def pointconv_bn_relu_reference(x, w, gamma, beta, eps=1e-5,
                                compute_dtype=jnp.float32):
    """`compute_dtype` rounds the conv inputs the same way the kernel does
    (the kernel accumulates the conv in f32 and does BN math in f32)."""
    xr = x.astype(compute_dtype).astype(jnp.float32)
    wr = w.astype(compute_dtype).astype(jnp.float32)
    y = lax.conv_general_dilated(
        xr, wr, (1, 1), "VALID",
        dimension_numbers=("NCHW", "OIHW", "NCHW"),
        precision=lax.Precision.HIGHEST)
    mean = jnp.mean(y, axis=(0, 2, 3), keepdims=True)
    var = jnp.mean((y - mean) ** 2, axis=(0, 2, 3), keepdims=True)
    yhat = (y - mean) * lax.rsqrt(var + eps)
    out = yhat * gamma.reshape(1, -1, 1, 1) + beta.reshape(1, -1, 1, 1)
    return jnp.maximum(out, 0.0)


if __name__ == "__main__":
    # Small shapes consistent with the module: N=2, inc=4, H=W=16, outc=8.
    N, Cin, H, W = 2, 4, 16, 16
    Cout = 8

    key = jax.random.PRNGKey(0)
    kx, kw, kg, kb = jax.random.split(key, 4)

    x = jax.random.normal(kx, (N, Cin, H, W), dtype=jnp.float32)
    weight = jax.random.normal(kw, (Cout, Cin, 1, 1), dtype=jnp.float32) * (1.0 / (Cin ** 0.5))
    gamma = 1.0 + 0.1 * jax.random.normal(kg, (Cout,), dtype=jnp.float32)
    beta = 0.1 * jax.random.normal(kb, (Cout,), dtype=jnp.float32)

    ref = pointconv_bn_relu_reference(x, weight, gamma, beta,
                                      compute_dtype=jnp.bfloat16)

    # 1) Single-kernel fused fast path (default for this small layer).
    out_fused = jax.block_until_ready(pointconv_bn_relu(x, weight, gamma, beta))
    assert out_fused.shape == (N, Cout, H, W)
    assert jnp.allclose(out_fused.astype(jnp.float32), ref,
                        atol=5e-2, rtol=5e-2), "fused path mismatch"

    # 2) Two-pass tiled path on the same inputs.
    out_two = jax.block_until_ready(
        pointconv_bn_relu(x, weight, gamma, beta, allow_fused=False))
    assert jnp.allclose(out_two.astype(jnp.float32), ref,
                        atol=5e-2, rtol=5e-2), "two-pass path mismatch"

    # 3) Two-pass path with a non-dividing H*W (exercises big tiles + tail
    #    masking of the BN statistics).
    H2, W2 = 250, 400                       # HW = 100000, no 128-multiple divisor
    x2 = jax.random.normal(kx, (1, Cin, H2, W2), dtype=jnp.float32)
    ref2 = pointconv_bn_relu_reference(x2, weight, gamma, beta,
                                       compute_dtype=jnp.bfloat16)
    out2 = jax.block_until_ready(
        pointconv_bn_relu(x2, weight, gamma, beta, allow_fused=False))
    assert out2.shape == (1, Cout, H2, W2)
    assert jnp.allclose(out2.astype(jnp.float32), ref2,
                        atol=5e-2, rtol=5e-2), "tail-masked path mismatch"

    print("KERNEL_OK")
</pallas_src>

<mosaic_0001>
module attributes {stable_mosaic.version = 11 : i64} {
  func.func @_fused_kernel(%arg0: i32, %arg1: memref<2x4x256xf32, #tpu.memory_space<vmem>>, %arg2: memref<8x4xbf16, #tpu.memory_space<vmem>>, %arg3: memref<8x1xf32, #tpu.memory_space<vmem>>, %arg4: memref<8x1xf32, #tpu.memory_space<vmem>>, %arg5: memref<2x8x256xbf16, #tpu.memory_space<vmem>>, %arg6: memref<2x8x256xf32, #tpu.memory_space<vmem>>) attributes {dimension_semantics = [#tpu.dimension_semantics<arbitrary>], iteration_bounds = array<i64: 1>, scalar_prefetch = 0 : i64, scratch_operands = 1 : i64, tpu.core_type = #tpu.core_type<tc>, window_params = [{pipeline_mode = #tpu.pipeline_mode<synchronous>, transform_indices = @transform_0, window_bounds = array<i64: 2, 4, 256>}, {pipeline_mode = #tpu.pipeline_mode<synchronous>, transform_indices = @transform_1, window_bounds = array<i64: 8, 4>}, {pipeline_mode = #tpu.pipeline_mode<synchronous>, transform_indices = @transform_2, window_bounds = array<i64: 8, 1>}, {pipeline_mode = #tpu.pipeline_mode<synchronous>, transform_indices = @transform_3, window_bounds = array<i64: 8, 1>}, {pipeline_mode = #tpu.pipeline_mode<synchronous>, transform_indices = @transform_4, window_bounds = array<i64: 2, 8, 256>}]} {
    %c0 = arith.constant 0 : index
    %c0_0 = arith.constant 0 : index
    %0 = vector.load %arg2[%c0, %c0_0] : memref<8x4xbf16, #tpu.memory_space<vmem>>, vector<8x4xbf16>
    %cst = arith.constant 0.000000e+00 : f32
    %1 = vector.broadcast %cst : f32 to vector<8x1xf32>
    %cst_1 = arith.constant 0.000000e+00 : f32
    %2 = vector.broadcast %cst_1 : f32 to vector<8x1xf32>
    %c0_2 = arith.constant 0 : index
    %c0_3 = arith.constant 0 : index
    %c0_4 = arith.constant 0 : index
    %3 = vector.load %arg1[%c0_2, %c0_3, %c0_4] : memref<2x4x256xf32, #tpu.memory_space<vmem>>, vector<1x4x256xf32>
    %4 = vector.shape_cast %3 : vector<1x4x256xf32> to vector<4x256xf32>
    %5 = arith.truncf %4 : vector<4x256xf32> to vector<4x256xbf16>
    %cst_5 = arith.constant dense<0.000000e+00> : vector<8x256xf32>
    %6 = tpu.matmul %0, %5, %cst_5 {dimension_numbers = #tpu.dot_dimension_numbers<[1], [0], [0], [1], [0, 0, 1, 1], [], []>} : vector<8x4xbf16>, vector<4x256xbf16>, vector<8x256xf32> -> vector<8x256xf32>
    %c0_6 = arith.constant 0 : index
    %c0_7 = arith.constant 0 : index
    %c0_8 = arith.constant 0 : index
    %7 = vector.load %arg6[%c0_6, %c0_7, %c0_8] : memref<2x8x256xf32, #tpu.memory_space<vmem>>, vector<1x8x256xf32>
    %8 = vector.shape_cast %7 : vector<1x8x256xf32> to vector<8x256xf32>
    %9 = vector.shape_cast %6 : vector<8x256xf32> to vector<1x8x256xf32>
    tpu.vector_store %arg6[%c0_6, %c0_7, %c0_8], %9 {strides = array<i32>} : memref<2x8x256xf32, #tpu.memory_space<vmem>>, vector<1x8x256xf32>,
    %cst_9 = arith.constant dense<0.000000e+00> : vector<8xf32>
    %10 = vector.multi_reduction <add>, %6, %cst_9 [1] : vector<8x256xf32> to vector<8xf32>
    %11 = vector.shape_cast %10 : vector<8xf32> to vector<8x1xf32>
    %12 = arith.addf %1, %11 : vector<8x1xf32>
    %13 = arith.mulf %6, %6 : vector<8x256xf32>
    %cst_10 = arith.constant dense<0.000000e+00> : vector<8xf32>
    %14 = vector.multi_reduction <add>, %13, %cst_10 [1] : vector<8x256xf32> to vector<8xf32>
    %15 = vector.shape_cast %14 : vector<8xf32> to vector<8x1xf32>
    %16 = arith.addf %2, %15 : vector<8x1xf32>
    %c1 = arith.constant 1 : index
    %c0_11 = arith.constant 0 : index
    %c0_12 = arith.constant 0 : index
    %17 = vector.load %arg1[%c1, %c0_11, %c0_12] : memref<2x4x256xf32, #tpu.memory_space<vmem>>, vector<1x4x256xf32>
    %18 = vector.shape_cast %17 : vector<1x4x256xf32> to vector<4x256xf32>
    %19 = arith.truncf %18 : vector<4x256xf32> to vector<4x256xbf16>
    %cst_13 = arith.constant dense<0.000000e+00> : vector<8x256xf32>
    %20 = tpu.matmul %0, %19, %cst_13 {dimension_numbers = #tpu.dot_dimension_numbers<[1], [0], [0], [1], [0, 0, 1, 1], [], []>} : vector<8x4xbf16>, vector<4x256xbf16>, vector<8x256xf32> -> vector<8x256xf32>
    %c1_14 = arith.constant 1 : index
    %c0_15 = arith.constant 0 : index
    %c0_16 = arith.constant 0 : index
    %21 = vector.load %arg6[%c1_14, %c0_15, %c0_16] : memref<2x8x256xf32, #tpu.memory_space<vmem>>, vector<1x8x256xf32>
    %22 = vector.shape_cast %21 : vector<1x8x256xf32> to vector<8x256xf32>
    %23 = vector.shape_cast %20 : vector<8x256xf32> to vector<1x8x256xf32>
    tpu.vector_store %arg6[%c1_14, %c0_15, %c0_16], %23 {strides = array<i32>} : memref<2x8x256xf32, #tpu.memory_space<vmem>>, vector<1x8x256xf32>,
    %cst_17 = arith.constant dense<0.000000e+00> : vector<8xf32>
    %24 = vector.multi_reduction <add>, %20, %cst_17 [1] : vector<8x256xf32> to vector<8xf32>
    %25 = vector.shape_cast %24 : vector<8xf32> to vector<8x1xf32>
    %26 = arith.addf %12, %25 : vector<8x1xf32>
    %27 = arith.mulf %20, %20 : vector<8x256xf32>
    %cst_18 = arith.constant dense<0.000000e+00> : vector<8xf32>
    %28 = vector.multi_reduction <add>, %27, %cst_18 [1] : vector<8x256xf32> to vector<8xf32>
    %29 = vector.shape_cast %28 : vector<8xf32> to vector<8x1xf32>
    %30 = arith.addf %16, %29 : vector<8x1xf32>
    %cst_19 = arith.constant 0.001953125 : f32
    %31 = vector.broadcast %cst_19 : f32 to vector<8x1xf32>
    %32 = arith.mulf %26, %31 : vector<8x1xf32>
    %cst_20 = arith.constant 0.001953125 : f32
    %33 = vector.broadcast %cst_20 : f32 to vector<8x1xf32>
    %34 = arith.mulf %30, %33 : vector<8x1xf32>
    %35 = arith.mulf %32, %32 : vector<8x1xf32>
    %36 = arith.subf %34, %35 : vector<8x1xf32>
    %cst_21 = arith.constant 0.000000e+00 : f32
    %37 = vector.broadcast %cst_21 : f32 to vector<8x1xf32>
    %38 = arith.maximumf %36, %37 : vector<8x1xf32>
    %c0_22 = arith.constant 0 : index
    %c0_23 = arith.constant 0 : index
    %39 = vector.load %arg3[%c0_22, %c0_23] : memref<8x1xf32, #tpu.memory_space<vmem>>, vector<8x1xf32>
    %cst_24 = arith.constant 9.99999974E-6 : f32
    %40 = vector.broadcast %cst_24 : f32 to vector<8x1xf32>
    %41 = arith.addf %38, %40 : vector<8x1xf32>
    %42 = math.rsqrt %41 : vector<8x1xf32>
    %43 = arith.mulf %39, %42 : vector<8x1xf32>
    %c0_25 = arith.constant 0 : index
    %c0_26 = arith.constant 0 : index
    %44 = vector.load %arg4[%c0_25, %c0_26] : memref<8x1xf32, #tpu.memory_space<vmem>>, vector<8x1xf32>
    %45 = arith.mulf %32, %43 : vector<8x1xf32>
    %46 = arith.subf %44, %45 : vector<8x1xf32>
    %c0_27 = arith.constant 0 : index
    %c0_28 = arith.constant 0 : index
    %c0_29 = arith.constant 0 : index
    %47 = vector.load %arg6[%c0_27, %c0_28, %c0_29] : memref<2x8x256xf32, #tpu.memory_space<vmem>>, vector<1x8x256xf32>
    %48 = vector.shape_cast %47 : vector<1x8x256xf32> to vector<8x256xf32>
    %49 = vector.broadcast %43 : vector<8x1xf32> to vector<8x256xf32>
    %50 = arith.mulf %48, %49 : vector<8x256xf32>
    %51 = vector.broadcast %46 : vector<8x1xf32> to vector<8x256xf32>
    %52 = arith.addf %50, %51 : vector<8x256xf32>
    %cst_30 = arith.constant 0.000000e+00 : f32
    %53 = vector.broadcast %cst_30 : f32 to vector<8x256xf32>
    %54 = arith.maximumf %52, %53 : vector<8x256xf32>
    %55 = arith.truncf %54 : vector<8x256xf32> to vector<8x256xbf16>
    %c0_31 = arith.constant 0 : index
    %c0_32 = arith.constant 0 : index
    %c0_33 = arith.constant 0 : index
    %56 = vector.load %arg5[%c0_31, %c0_32, %c0_33] : memref<2x8x256xbf16, #tpu.memory_space<vmem>>, vector<1x8x256xbf16>
    %57 = vector.shape_cast %56 : vector<1x8x256xbf16> to vector<8x256xbf16>
    %58 = vector.shape_cast %55 : vector<8x256xbf16> to vector<1x8x256xbf16>
    tpu.vector_store %arg5[%c0_31, %c0_32, %c0_33], %58 {strides = array<i32>} : memref<2x8x256xbf16, #tpu.memory_space<vmem>>, vector<1x8x256xbf16>,
    %c1_34 = arith.constant 1 : index
    %c0_35 = arith.constant 0 : index
    %c0_36 = arith.constant 0 : index
    %59 = vector.load %arg6[%c1_34, %c0_35, %c0_36] : memref<2x8x256xf32, #tpu.memory_space<vmem>>, vector<1x8x256xf32>
    %60 = vector.shape_cast %59 : vector<1x8x256xf32> to vector<8x256xf32>
    %61 = vector.broadcast %43 : vector<8x1xf32> to vector<8x256xf32>
    %62 = arith.mulf %60, %61 : vector<8x256xf32>
    %63 = vector.broadcast %46 : vector<8x1xf32> to vector<8x256xf32>
    %64 = arith.addf %62, %63 : vector<8x256xf32>
    %cst_37 = arith.constant 0.000000e+00 : f32
    %65 = vector.broadcast %cst_37 : f32 to vector<8x256xf32>
    %66 = arith.maximumf %64, %65 : vector<8x256xf32>
    %67 = arith.truncf %66 : vector<8x256xf32> to vector<8x256xbf16>
    %c1_38 = arith.constant 1 : index
    %c0_39 = arith.constant 0 : index
    %c0_40 = arith.constant 0 : index
    %68 = vector.load %arg5[%c1_38, %c0_39, %c0_40] : memref<2x8x256xbf16, #tpu.memory_space<vmem>>, vector<1x8x256xbf16>
    %69 = vector.shape_cast %68 : vector<1x8x256xbf16> to vector<8x256xbf16>
    %70 = vector.shape_cast %67 : vector<8x256xbf16> to vector<1x8x256xbf16>
    tpu.vector_store %arg5[%c1_38, %c0_39, %c0_40], %70 {strides = array<i32>} : memref<2x8x256xbf16, #tpu.memory_space<vmem>>, vector<1x8x256xbf16>,
    return
  }
  func.func @transform_0(%arg0: i32) -> (i32, i32, i32) {
    %c0_i32 = arith.constant 0 : i32
    %c0_i32_0 = arith.constant 0 : i32
    %c0_i32_1 = arith.constant 0 : i32
    %c0_i32_2 = arith.constant 0 : i32
    return %c0_i32, %c0_i32_0, %c0_i32_1 : i32, i32, i32
  }
  func.func @transform_1(%arg0: i32) -> (i32, i32) {
    %c0_i32 = arith.constant 0 : i32
    %c0_i32_0 = arith.constant 0 : i32
    %c0_i32_1 = arith.constant 0 : i32
    return %c0_i32, %c0_i32_0 : i32, i32
  }
  func.func @transform_2(%arg0: i32) -> (i32, i32) {
    %c0_i32 = arith.constant 0 : i32
    %c0_i32_0 = arith.constant 0 : i32
    %c0_i32_1 = arith.constant 0 : i32
    return %c0_i32, %c0_i32_0 : i32, i32
  }
  func.func @transform_3(%arg0: i32) -> (i32, i32) {
    %c0_i32 = arith.constant 0 : i32
    %c0_i32_0 = arith.constant 0 : i32
    %c0_i32_1 = arith.constant 0 : i32
    return %c0_i32, %c0_i32_0 : i32, i32
  }
  func.func @transform_4(%arg0: i32) -> (i32, i32, i32) {
    %c0_i32 = arith.constant 0 : i32
    %c0_i32_0 = arith.constant 0 : i32
    %c0_i32_1 = arith.constant 0 : i32
    %c0_i32_2 = arith.constant 0 : i32
    return %c0_i32, %c0_i32_0, %c0_i32_1 : i32, i32, i32
  }
}

</mosaic_0001>

<llo_original>
// kernel: pointconv_bn_relu.1
$region0: #{pointconv_bn_relu.1}
  #allocation0 [shape = 'u32[]', space=smem, size = 0x4, offset = 0x4, fixed_abs, tag = 'smem constant byte address 0x4 - core index']
  #allocation1 [shape = 'u32[144,128]{1,0:T(1,128)}', space=vmem, size = 0x12000, scoped, tag = 'internal scratch']
  #allocation2 [shape = 'f32[2,8,256]{2,1,0:T(8,128)}', space=vmem, size = 0x4000, scoped, tag = 'scratch operand']
  %s0 = inlined_call_operand.vmem [shape: f32[2,4,256], index: 0, kind: input, shape index: {}]
  %s1 = inlined_call_operand.vmem [shape: bf16[8,4], index: 1, kind: input, shape index: {}]
  %s2 = inlined_call_operand.vmem [shape: f32[8,1], index: 2, kind: input, shape index: {}]
  %s3 = inlined_call_operand.vmem [shape: f32[8,1], index: 3, kind: input, shape index: {}]
  %s4 = inlined_call_operand.vmem [shape: bf16[2,8,256], index: 4, kind: output, shape index: {}]
  %s5 = sld [smem:[#allocation0]]
  $region26: #{pointconv_bn_relu.1} parent=0
    _
  %s7 = ssub.s32 1, %s5
  %s8 = scalar_select 0, %s7, %s5
  // Predicated region
  $region2: #{pointconv_bn_relu.1} parent=0 // pred_check
    _
  $region3: #{pointconv_bn_relu.1} parent=0 // pred_check_branch
    %10 = sbr.rel (0) target = $region5
  $region4: #{pointconv_bn_relu.1} parent=0 // pred_region
    _
  $region5: #{pointconv_bn_relu.1} parent=0 // pred_fallthru
    _
  // Predicated region
  $region6: #{pointconv_bn_relu.1} parent=0 // pred_check
    _
  $region7: #{pointconv_bn_relu.1} parent=0 // pred_check_branch
    %12 = sbr.rel (0) target = $region9
  $region8: #{pointconv_bn_relu.1} parent=0 // pred_region
    _
  $region9: #{pointconv_bn_relu.1} parent=0 // pred_fallthru
    _
  // Predicated region
  $region10: #{pointconv_bn_relu.1} parent=0 // pred_check
    _
  $region11: #{pointconv_bn_relu.1} parent=0 // pred_check_branch
    %14 = sbr.rel (0) target = $region13
  $region12: #{pointconv_bn_relu.1} parent=0 // pred_region
    _
  $region13: #{pointconv_bn_relu.1} parent=0 // pred_fallthru
    _
  // Predicated region
  $region14: #{pointconv_bn_relu.1} parent=0 // pred_check
    _
  $region15: #{pointconv_bn_relu.1} parent=0 // pred_check_branch
    %16 = sbr.rel (0) target = $region17
  $region16: #{pointconv_bn_relu.1} parent=0 // pred_region
    _
  $region17: #{pointconv_bn_relu.1} parent=0 // pred_fallthru
    _
  %v18 = vld [vmem:[%s1] sm:$0xf]
  %v19 = vld [vmem:[%s0] sm:$0xff]
  %v21 = vcombine.high %v19, %v19
  %v23 = vpack.c.bf16 %v19, %v19
  %v24 = vpack.c.bf16 %v21, %v21
  %vm25 = vcmask 31744
  %v27 = vsel %vm25, %v18, 0
  %vm29 = vcmask 1041408
  %v31 = vsel %vm29, %v23, 0
  %v34 = vsel %vm29, %v24, 0
  %36 = vmatprep.subr.bf16.mxu0 %v34
  %37 = vmatpush1.bf16.msra.mxu0 %v31
  %38 = vmatprep.subr.bf16.mxu0 0
  %39 = vmatpush1.bf16.msra.mxu0 0
  %40 = vmatprep.subr.bf16.mxu0 0
  %41 = vmatpush1.bf16.msra.mxu0 0
  %42 = vmatprep.subr.bf16.mxu0 0
  %43 = vmatpush1.bf16.msra.mxu0 0
  %44 = vmatprep.subr.bf16.mxu0 0
  %45 = vmatpush1.bf16.msra.mxu0 0
  %46 = vmatprep.subr.bf16.mxu0 0
  %47 = vmatpush1.bf16.msra.mxu0 0
  %48 = vmatprep.subr.bf16.mxu0 0
  %49 = vmatpush1.bf16.msra.mxu0 0
  %50 = vmatprep.subr.bf16.mxu0 0
  %51 = vmatpush1.bf16.msra.mxu0 0
  %52 = vmatprep.subr.bf16.mxu0 0
  %53 = vmatpush1.bf16.msra.mxu0 0
  %54 = vmatprep.subr.bf16.mxu0 0
  %55 = vmatpush1.bf16.msra.mxu0 0
  %56 = vmatprep.subr.bf16.mxu0 0
  %57 = vmatpush1.bf16.msra.mxu0 0
  %58 = vmatprep.subr.bf16.mxu0 0
  %59 = vmatpush1.bf16.msra.mxu0 0
  %60 = vmatprep.subr.bf16.mxu0 0
  %61 = vmatpush1.bf16.msra.mxu0 0
  %62 = vmatprep.subr.bf16.mxu0 0
  %63 = vmatpush1.bf16.msra.mxu0 0
  %64 = vmatprep.subr.bf16.mxu0 0
  %65 = vmatpush1.bf16.msra.mxu0 0
  %66 = vmatprep.subr.bf16.mxu0 0
  %67 = vmatpush1.bf16.msra.mxu0 0
  %68 = vmatprep.mubr.bf16.mxu0 0
  %69 = vmatmul.mubr.bf16.gmra.mrb[0].mxu0 %v27
  %v70 = vpop.f32.mrb[0].mxu0
  %v71 = vadd.f32 0.0, %v70
  %v72 = vpop.f32.mrb[0].mxu0
  %v73 = vadd.f32 0.0, %v72
  %v74 = vpop.f32.mrb[0].mxu0
  %v75 = vpop.f32.mrb[0].mxu0
  %76 = vdwg.mxu0
  %77 = vst [vmem:[#allocation2] sm:$0xff] %v71
  %78 = vst [vmem:[#allocation2 + $0x8] sm:$0xff] %v73
  %v79 = vadd.f32 %v71, %v73
  %80 = vadd.xlane.f32.xlu0 %v79
  %v81 = vpop.xlane.xlu0 %80
  %v82 = vadd.f32 %v81, 0.0
  %v83 = vmul.f32 %v71, %v71
  %v84 = vmul.f32 %v73, %v73
  %v85 = vadd.f32 %v83, %v84
  %86 = vadd.xlane.f32.xlu0 %v85
  %v87 = vpop.xlane.xlu0 %86
  %v88 = vadd.f32 %v87, 0.0
  %s89 = scalar_lea.vmem %s0, 8
  %v90 = vld [vmem:[%s89] sm:$0xff]
  %v92 = vcombine.high %v90, %v90
  %v94 = vpack.c.bf16 %v90, %v90
  %v95 = vpack.c.bf16 %v92, %v92
  %v97 = vsel %vm29, %v94, 0
  %v100 = vsel %vm29, %v95, 0
  %102 = vmatprep.subr.bf16.mxu0 %v100
  %103 = vmatpush1.bf16.msra.mxu0 %v97
  %104 = vmatprep.subr.bf16.mxu0 0
  %105 = vmatpush1.bf16.msra.mxu0 0
  %106 = vmatprep.subr.bf16.mxu0 0
  %107 = vmatpush1.bf16.msra.mxu0 0
  %108 = vmatprep.subr.bf16.mxu0 0
  %109 = vmatpush1.bf16.msra.mxu0 0
  %110 = vmatprep.subr.bf16.mxu0 0
  %111 = vmatpush1.bf16.msra.mxu0 0
  %112 = vmatprep.subr.bf16.mxu0 0
  %113 = vmatpush1.bf16.msra.mxu0 0
  %114 = vmatprep.subr.bf16.mxu0 0
  %115 = vmatpush1.bf16.msra.mxu0 0
  %116 = vmatprep.subr.bf16.mxu0 0
  %117 = vmatpush1.bf16.msra.mxu0 0
  %118 = vmatprep.subr.bf16.mxu0 0
  %119 = vmatpush1.bf16.msra.mxu0 0
  %120 = vmatprep.subr.bf16.mxu0 0
  %121 = vmatpush1.bf16.msra.mxu0 0
  %122 = vmatprep.subr.bf16.mxu0 0
  %123 = vmatpush1.bf16.msra.mxu0 0
  %124 = vmatprep.subr.bf16.mxu0 0
  %125 = vmatpush1.bf16.msra.mxu0 0
  %126 = vmatprep.subr.bf16.mxu0 0
  %127 = vmatpush1.bf16.msra.mxu0 0
  %128 = vmatprep.subr.bf16.mxu0 0
  %129 = vmatpush1.bf16.msra.mxu0 0
  %130 = vmatprep.subr.bf16.mxu0 0
  %131 = vmatpush1.bf16.msra.mxu0 0
  %132 = vmatprep.subr.bf16.mxu0 0
  %133 = vmatpush1.bf16.msra.mxu0 0
  %134 = vmatprep.mubr.bf16.mxu0 0
  %135 = vmatmul.mubr.bf16.gmra.mrb[0].mxu0 %v27
  %v136 = vpop.f32.mrb[0].mxu0
  %v137 = vadd.f32 0.0, %v136
  %v138 = vpop.f32.mrb[0].mxu0
  %v139 = vadd.f32 0.0, %v138
  %v140 = vpop.f32.mrb[0].mxu0
  %v141 = vpop.f32.mrb[0].mxu0
  %142 = vdwg.mxu0
  %s143 = scalar_lea.vmem [#allocation2], 16
  %144 = vst [vmem:[%s143] sm:$0xff] %v137
  %145 = vst [vmem:[%s143 + $0x8] sm:$0xff] %v139
  %v146 = vadd.f32 %v137, %v139
  %147 = vadd.xlane.f32.xlu0 %v146
  %v148 = vpop.xlane.xlu0 %147
  %v149 = vadd.f32 %v82, %v148
  %v150 = vmul.f32 %v137, %v137
  %v151 = vmul.f32 %v139, %v139
  %v152 = vadd.f32 %v150, %v151
  %153 = vadd.xlane.f32.xlu0 %v152
  %v154 = vpop.xlane.xlu0 %153
  %v155 = vadd.f32 %v88, %v154
  %v156 = vmul.f32 %v149, 0.001953125
  %v157 = vmul.f32 %v155, 0.001953125
  %v158 = vmul.f32 %v156, %v156
  %v159 = vsub.f32 %v157, %v158
  %v160 = vmax.f32 %v159, 0.0
  %v161 = vld [vmem:[%s2] sm:$0xff]
  %v162 = vadd.f32 %v160, 1e-05
  %v163 = vrsqrt.pop %v162
  %v164 = vmul.f32 %v161, %v163
  %v165 = vld [vmem:[%s3] sm:$0xff]
  %v166 = vmul.f32 %v156, %v164
  %v167 = vsub.f32 %v165, %v166
  %v168 = vld [vmem:[#allocation2] sm:$0xff]
  %v169 = vld [vmem:[#allocation2 + $0x8] sm:$0xff]
  %171 = vset.pattern.permute.xlu0 0
  %172 = vperm.xlu0 %171, %v164
  %v173 = vpop.permute.xlu0 %172
  %v175 = vmul.f32 %v168, %v173
  %v176 = vmul.f32 %v169, %v173
  %178 = vset.pattern.permute.xlu0 0
  %179 = vperm.xlu0 %178, %v167
  %v180 = vpop.permute.xlu0 %179
  %v182 = vadd.f32 %v175, %v180
  %v183 = vadd.f32 %v176, %v180
  %v184 = vmax.f32 %v182, 0.0
  %v185 = vmax.f32 %v183, 0.0
  %v186 = vpack.c.bf16 %v184, %v184
  %v187 = vpack.c.bf16 %v185, %v185
  %v190 = vunpack.c.l.b16 %v186
  %v191 = vunpack.c.l.b16 %v187
  %v192 = vpack.c.b16 %v191, %v190
  %194 = vst [vmem:[%s4] sm:$0xff] %v192
  %v195 = vld [vmem:[%s143] sm:$0xff]
  %v196 = vld [vmem:[%s143 + $0x8] sm:$0xff]
  %v197 = vmul.f32 %v195, %v173
  %v198 = vmul.f32 %v196, %v173
  %v199 = vadd.f32 %v197, %v180
  %v200 = vadd.f32 %v198, %v180
  %v201 = vmax.f32 %v199, 0.0
  %v202 = vmax.f32 %v200, 0.0
  %v203 = vpack.c.bf16 %v201, %v201
  %v204 = vpack.c.bf16 %v202, %v202
  %v207 = vunpack.c.l.b16 %v203
  %v208 = vunpack.c.l.b16 %v204
  %v209 = vpack.c.b16 %v208, %v207
  %s211 = scalar_lea.vmem %s4, 8
  %212 = vst [vmem:[%s211] sm:$0xff] %v209
  // Predicated region
  $region18: #{pointconv_bn_relu.1} parent=0 // pred_check
    _
  $region19: #{pointconv_bn_relu.1} parent=0 // pred_check_branch
    %214 = sbr.rel (0) target = $region21
  $region20: #{pointconv_bn_relu.1} parent=0 // pred_region
    _
  $region21: #{pointconv_bn_relu.1} parent=0 // pred_fallthru
    _
  // Predicated region
  $region22: #{pointconv_bn_relu.1} parent=0 // pred_check
    _
  $region23: #{pointconv_bn_relu.1} parent=0 // pred_check_branch
    %216 = sbr.rel (0) target = $region25
  $region24: #{pointconv_bn_relu.1} parent=0 // pred_region
    _
  $region25: #{pointconv_bn_relu.1} parent=0 // pred_fallthru
    _

</llo_original>
